<compile_context>
chip_gen: v7x
topology: tpu7x:2x2x1
jax: 0.10.0
libtpu: 0.0.40
codegen_flags: <defaults>
</compile_context>

<pallas_src>
import jax
import jax.numpy as jnp
from jax.experimental import pallas as pl
from jax.experimental.pallas import tpu as pltpu


# ----------------------------------------------------------------------------
# Pallas kernel: direct HBM->HBM embedding-row gather
# ----------------------------------------------------------------------------
def _gather_rows_kernel(ids_ref, table_ref, out_ref, sems):
    # ids_ref   : SMEM (B,) int32 class ids (scalar prefetch).
    # table_ref : HBM  (n_classes, D) embedding table (memory_space=pl.ANY).
    # out_ref   : HBM  (B, D) output (memory_space=pl.ANY), written only by DMA.
    # sems      : DMA semaphores (K,) -- up to K row copies in flight.
    n_rows = out_ref.shape[0]       # static
    n_sems = sems.shape[0]          # static

    def row_copy(i):
        row = ids_ref[i]
        return pltpu.make_async_copy(
            table_ref.at[pl.ds(row, 1), :],   # (1, D) source row in HBM
            out_ref.at[pl.ds(i, 1), :],       # (1, D) destination row in HBM
            sems.at[i % n_sems],
        )

    # Prime: put up to n_sems row DMAs in flight.
    @pl.loop(0, min(n_sems, n_rows))
    def _prime(i):
        row_copy(i).start()

    # Steady state: retire row i, then immediately reuse its semaphore slot
    # for row i + n_sems, keeping n_sems descriptors in flight throughout.
    @pl.loop(0, n_rows)
    def _drain(i):
        row_copy(i).wait()

        @pl.when(i + n_sems < n_rows)
        def _():
            row_copy(i + n_sems).start()


# ----------------------------------------------------------------------------
# Wrapper (matches ClassEmbedder.forward semantics)
# ----------------------------------------------------------------------------
def class_embedder_forward(batch, emb_table, key="class", *, n_dma_slots=8):
    """batch[key]: (B,) integer class ids; emb_table: (n_classes, embed_dim).

    Returns (B, 1, embed_dim), identical to nn.Embedding(batch[key][:, None]).
    """
    class_ids = jnp.asarray(batch[key])
    B = class_ids.shape[0]
    n_classes, D = emb_table.shape

    # Bounds-safe: clamp ids so an out-of-range class id cannot cause an
    # out-of-bounds DMA (which would fault the chip).
    ids = jnp.clip(class_ids.astype(jnp.int32), 0, n_classes - 1)

    itemsize = jnp.dtype(emb_table.dtype).itemsize
    n_slots = max(1, min(n_dma_slots, B))

    out = pl.pallas_call(
        _gather_rows_kernel,
        out_shape=jax.ShapeDtypeStruct((B, D), emb_table.dtype),
        grid_spec=pltpu.PrefetchScalarGridSpec(
            num_scalar_prefetch=1,
            grid=(1,),                                        # single step: no grid-loop overhead
            in_specs=[pl.BlockSpec(memory_space=pl.ANY)],     # table stays in HBM
            out_specs=pl.BlockSpec(memory_space=pl.ANY),      # output written directly by DMA
            scratch_shapes=[pltpu.SemaphoreType.DMA((n_slots,))],
        ),
        compiler_params=pltpu.CompilerParams(
            dimension_semantics=("arbitrary",)),
        cost_estimate=pl.CostEstimate(
            flops=0, transcendentals=0,
            bytes_accessed=2 * B * D * itemsize),
    )(ids, emb_table)

    # batch[key][:, None] -> embedding => (B, 1, D); unsqueeze is free metadata.
    return out[:, None, :]


# ----------------------------------------------------------------------------
# Demo / self-test
# ----------------------------------------------------------------------------
if __name__ == "__main__":
    B = 4
    n_classes = 1000
    embed_dim = 512  # lane-dense (multiple of 128)

    root = jax.random.PRNGKey(0)
    k_emb, k_cls = jax.random.split(root)

    emb_table = 0.02 * jax.random.normal(
        k_emb, (n_classes, embed_dim), jnp.float32)
    class_ids = jax.random.randint(k_cls, (B,), 0, n_classes, dtype=jnp.int32)
    batch = {"class": class_ids}

    out = class_embedder_forward(batch, emb_table)
    out = jax.block_until_ready(out)

    # Reference: plain embedding lookup with the unsqueezed index.
    ref = emb_table[class_ids][:, None, :]

    assert out.shape == (B, 1, embed_dim), out.shape
    assert bool(jnp.all(jnp.isfinite(out)))
    assert bool(jnp.all(out == ref)), "Pallas gather mismatch vs reference"
    print("KERNEL_OK")
</pallas_src>

<mosaic_0001>
module attributes {stable_mosaic.version = 11 : i64} {
  func.func @_gather_rows_kernel(%arg0: i32, %arg1: memref<4xi32, #tpu.memory_space<smem>>, %arg2: memref<1000x512xf32, #tpu.memory_space<any>>, %arg3: memref<4x512xf32, #tpu.memory_space<any>>, %arg4: memref<4x!tpu.dma_semaphore, #tpu.memory_space<semaphore_mem>>) attributes {dimension_semantics = [#tpu.dimension_semantics<arbitrary>], iteration_bounds = array<i64: 1>, scalar_prefetch = 1 : i64, scratch_operands = 1 : i64, tpu.core_type = #tpu.core_type<tc>, window_params = [{}, {}]} {
    %c0_i32 = arith.constant 0 : i32
    %c4_i32 = arith.constant 4 : i32
    %0 = arith.addi %c0_i32, %c4_i32 : i32
    %c1_i32 = arith.constant 1 : i32
    scf.for %arg5 = %c0_i32 to %0 step %c1_i32  : i32 {
      %c1_i32_5 = arith.constant 1 : i32
      %2 = arith.muli %arg5, %c1_i32_5 : i32
      %c0_i32_6 = arith.constant 0 : i32
      %3 = arith.addi %c0_i32_6, %2 : i32
      %4 = arith.index_cast %3 : i32 to index
      %5 = memref.load %arg1[%4] : memref<4xi32, #tpu.memory_space<smem>>
      %c4_i32_7 = arith.constant 4 : i32
      %c0_i32_8 = arith.constant 0 : i32
      %6 = arith.cmpi eq, %c4_i32_7, %c0_i32_8 : i32
      %c1_i32_9 = arith.constant 1 : i32
      %7 = arith.select %6, %c1_i32_9, %c4_i32_7 : i32
      %8 = arith.remsi %3, %7 : i32
      %c0_i32_10 = arith.constant 0 : i32
      %9 = arith.cmpi ne, %8, %c0_i32_10 : i32
      %c0_i32_11 = arith.constant 0 : i32
      %10 = arith.cmpi slt, %8, %c0_i32_11 : i32
      %c0_i32_12 = arith.constant 0 : i32
      %11 = arith.cmpi slt, %7, %c0_i32_12 : i32
      %12 = arith.xori %10, %11 : i1
      %13 = arith.andi %12, %9 : i1
      %14 = arith.addi %8, %7 : i32
      %15 = arith.select %13, %14, %8 : i32
      %c0_i32_13 = arith.constant 0 : i32
      %16 = tpu.memref_slice %arg2[%5, %c0_i32_13] : memref<1000x512xf32, #tpu.memory_space<any>> -> memref<1x512xf32, #tpu.memory_space<any>>
      %c0_i32_14 = arith.constant 0 : i32
      %17 = tpu.memref_slice %arg3[%3, %c0_i32_14] : memref<4x512xf32, #tpu.memory_space<any>> -> memref<1x512xf32, #tpu.memory_space<any>>
      %18 = tpu.memref_slice %arg4[%15] : memref<4x!tpu.dma_semaphore, #tpu.memory_space<semaphore_mem>> -> memref<1x!tpu.dma_semaphore, #tpu.memory_space<semaphore_mem>>
      %19 = tpu.memref_squeeze %18 : memref<1x!tpu.dma_semaphore, #tpu.memory_space<semaphore_mem>> -> memref<!tpu.dma_semaphore, #tpu.memory_space<semaphore_mem>>
      tpu.enqueue_dma source(%16 : memref<1x512xf32, #tpu.memory_space<any>>) target(%17 : memref<1x512xf32, #tpu.memory_space<any>>) target_semaphore(%19 : memref<!tpu.dma_semaphore, #tpu.memory_space<semaphore_mem>>)
    }
    %c4_i32_0 = arith.constant 4 : i32
    %c0_i32_1 = arith.constant 0 : i32
    %c4_i32_2 = arith.constant 4 : i32
    %1 = arith.addi %c0_i32_1, %c4_i32_2 : i32
    %c1_i32_3 = arith.constant 1 : i32
    scf.for %arg5 = %c0_i32_1 to %1 step %c1_i32_3  : i32 {
      %c1_i32_5 = arith.constant 1 : i32
      %2 = arith.muli %arg5, %c1_i32_5 : i32
      %c0_i32_6 = arith.constant 0 : i32
      %3 = arith.addi %c0_i32_6, %2 : i32
      %4 = arith.index_cast %3 : i32 to index
      %5 = memref.load %arg1[%4] : memref<4xi32, #tpu.memory_space<smem>>
      %c4_i32_7 = arith.constant 4 : i32
      %c0_i32_8 = arith.constant 0 : i32
      %6 = arith.cmpi eq, %c4_i32_7, %c0_i32_8 : i32
      %c1_i32_9 = arith.constant 1 : i32
      %7 = arith.select %6, %c1_i32_9, %c4_i32_7 : i32
      %8 = arith.remsi %3, %7 : i32
      %c0_i32_10 = arith.constant 0 : i32
      %9 = arith.cmpi ne, %8, %c0_i32_10 : i32
      %c0_i32_11 = arith.constant 0 : i32
      %10 = arith.cmpi slt, %8, %c0_i32_11 : i32
      %c0_i32_12 = arith.constant 0 : i32
      %11 = arith.cmpi slt, %7, %c0_i32_12 : i32
      %12 = arith.xori %10, %11 : i1
      %13 = arith.andi %12, %9 : i1
      %14 = arith.addi %8, %7 : i32
      %15 = arith.select %13, %14, %8 : i32
      %c0_i32_13 = arith.constant 0 : i32
      %16 = tpu.memref_slice %arg2[%5, %c0_i32_13] : memref<1000x512xf32, #tpu.memory_space<any>> -> memref<1x512xf32, #tpu.memory_space<any>>
      %c0_i32_14 = arith.constant 0 : i32
      %17 = tpu.memref_slice %arg3[%3, %c0_i32_14] : memref<4x512xf32, #tpu.memory_space<any>> -> memref<1x512xf32, #tpu.memory_space<any>>
      %18 = tpu.memref_slice %arg4[%15] : memref<4x!tpu.dma_semaphore, #tpu.memory_space<semaphore_mem>> -> memref<1x!tpu.dma_semaphore, #tpu.memory_space<semaphore_mem>>
      %19 = tpu.memref_squeeze %18 : memref<1x!tpu.dma_semaphore, #tpu.memory_space<semaphore_mem>> -> memref<!tpu.dma_semaphore, #tpu.memory_space<semaphore_mem>>
      tpu.wait_dma2 semaphore(%19 : memref<!tpu.dma_semaphore, #tpu.memory_space<semaphore_mem>>) src(%16 : memref<1x512xf32, #tpu.memory_space<any>>) dst(%17 : memref<1x512xf32, #tpu.memory_space<any>>)
      %c4_i32_15 = arith.constant 4 : i32
      %20 = arith.addi %3, %c4_i32_15 : i32
      %c4_i32_16 = arith.constant 4 : i32
      %21 = arith.cmpi slt, %20, %c4_i32_16 : i32
      %22 = arith.extui %21 : i1 to i32
      %c0_i32_17 = arith.constant 0 : i32
      %23 = arith.cmpi ne, %22, %c0_i32_17 : i32
      scf.if %23 {
        %c4_i32_18 = arith.constant 4 : i32
        %24 = arith.addi %3, %c4_i32_18 : i32
        %25 = arith.index_cast %24 : i32 to index
        %26 = memref.load %arg1[%25] : memref<4xi32, #tpu.memory_space<smem>>
        %c4_i32_19 = arith.constant 4 : i32
        %c0_i32_20 = arith.constant 0 : i32
        %27 = arith.cmpi eq, %c4_i32_19, %c0_i32_20 : i32
        %c1_i32_21 = arith.constant 1 : i32
        %28 = arith.select %27, %c1_i32_21, %c4_i32_19 : i32
        %29 = arith.remsi %24, %28 : i32
        %c0_i32_22 = arith.constant 0 : i32
        %30 = arith.cmpi ne, %29, %c0_i32_22 : i32
        %c0_i32_23 = arith.constant 0 : i32
        %31 = arith.cmpi slt, %29, %c0_i32_23 : i32
        %c0_i32_24 = arith.constant 0 : i32
        %32 = arith.cmpi slt, %28, %c0_i32_24 : i32
        %33 = arith.xori %31, %32 : i1
        %34 = arith.andi %33, %30 : i1
        %35 = arith.addi %29, %28 : i32
        %36 = arith.select %34, %35, %29 : i32
        %c0_i32_25 = arith.constant 0 : i32
        %37 = tpu.memref_slice %arg2[%26, %c0_i32_25] : memref<1000x512xf32, #tpu.memory_space<any>> -> memref<1x512xf32, #tpu.memory_space<any>>
        %c0_i32_26 = arith.constant 0 : i32
        %38 = tpu.memref_slice %arg3[%24, %c0_i32_26] : memref<4x512xf32, #tpu.memory_space<any>> -> memref<1x512xf32, #tpu.memory_space<any>>
        %39 = tpu.memref_slice %arg4[%36] : memref<4x!tpu.dma_semaphore, #tpu.memory_space<semaphore_mem>> -> memref<1x!tpu.dma_semaphore, #tpu.memory_space<semaphore_mem>>
        %40 = tpu.memref_squeeze %39 : memref<1x!tpu.dma_semaphore, #tpu.memory_space<semaphore_mem>> -> memref<!tpu.dma_semaphore, #tpu.memory_space<semaphore_mem>>
        tpu.enqueue_dma source(%37 : memref<1x512xf32, #tpu.memory_space<any>>) target(%38 : memref<1x512xf32, #tpu.memory_space<any>>) target_semaphore(%40 : memref<!tpu.dma_semaphore, #tpu.memory_space<semaphore_mem>>)
      } else {
      }
    }
    %c4_i32_4 = arith.constant 4 : i32
    return
  }
}

</mosaic_0001>

<llo_original>
// kernel: tpu_custom_call.1
$region0: #{tpu_custom_call.1}
  #allocation0 [shape = 'u32[]', space=smem, size = 0x4, offset = 0x4, fixed_abs, tag = 'smem constant byte address 0x4 - core index']
  #allocation1 [shape = 'u32[144,128]{1,0:T(1,128)}', space=vmem, size = 0x12000, scoped, tag = 'internal scratch']
  #allocation2 [shape = 's32[4]{0}', space=sflag, size = 0x10, scoped, tag = 'scratch operand']
  #allocation3 [shape = 's32[1]{0}', space=sflag, size = 0x4, scoped, tag = 'scoped memory for tpu_custom_call.1']
  #allocation4 [shape = 'u8[512]{0}', space=smem, size = 0x200, scoped, tag = 'prefetched SMEM operand 0']
  #allocation5 [shape = 's32[]', space=sflag, size = 0x4, offset = 0, fixed_abs, tag = 'sflag constant byte address 0x0 - dummy sync flag']
  #allocation7 [shape = 's32[]', space=sflag, size = 0x4, offset = 0, fixed_abs, tag = 'sflag constant byte address 0x0 - dummy sync flag']
  %s0 = inlined_call_operand.hbm [shape: s32[4], index: 0, kind: input, shape index: {}]
  %s1 = inlined_call_operand.hbm [shape: f32[1000,512], index: 1, kind: input, shape index: {}]
  %s2 = inlined_call_operand.hbm [shape: f32[4,512], index: 2, kind: output, shape index: {}]
  %s3 = sld [smem:[#allocation0]]
  $region20: #{tpu_custom_call.1} parent=0
    _
  %s5 = ssub.s32 1, %s3
  %s6 = scalar_select 0, %s5, %s3
  %8 = dma.hbm_to_smem %s0, 16, [#allocation4], [#allocation3]
  %9 = dma.done [#allocation3], 16
  %10 = sfence
  loop: start=0, step=1, limit=4
  $region2: #{tpu_custom_call.1} parent=0 // loop_pre_header
    _
  $region3: #{tpu_custom_call.1} parent=0 // loop_header
    %s12 = sphi 0, %s16
    %p13 = scmp.ge.s32.totalorder %s12, 4
  $region4: #{tpu_custom_call.1} parent=0 // loop_header_branch
    %15 = sbr.rel (%p13) target = $region8
  $region5: #{tpu_custom_call.1} parent=0 // loop_body
    #allocation6 [shape = 'u32[3]{0}', space=smem, size = 0xc, scoped, tag = 'DMA stride descriptor']
    %s17 = sld [smem:[#allocation4 + %s12]]
    %p18 = scmp.lt.s32.totalorder %s12, 0
    %s19 = ssub.s32 0, %s12
    %s20 = scalar_select %p18, %s19, %s12
    %s21 = sand.u32 %s20, 3
    %s22 = ssub.s32 0, %s21
    %s23 = scalar_select %p18, %s22, %s21
    %p24 = scmp.ne.s32.totalorder %s23, 0
    %p25 = scmp.lt.s32.totalorder %s23, 0
    %p26 = pnand %p25, %p24
    %p27 = pneg %p26
    %s28 = sadd.s32 %s23, 4
    %s29 = scalar_select %p27, %s28, %s23
    %s30 = sshrl.u32 %s17, 3
    %s31 = sand.u32 %s17, 7
    %s32 = smul.u32 %s30, 32
    %s33 = sadd.s32 %s31, %s32
    %s34 = smul.addr %s33, 16
    %s35 = scalar_lea.hbm %s1, %s34
    %s36 = sshrl.u32 %s12, 2
    %s37 = sand.u32 %s12, 3
    %s38 = smul.u32 %s36, 16
    %s39 = sadd.s32 %s37, %s38
    %s40 = smul.addr %s39, 16
    %s41 = scalar_lea.hbm %s2, %s40
    %s42 = scalar_lea.sflag [#allocation2], %s29
    %s44 = sshll.u32 1, 14
    %s45 = sxor.u32 4294967295, %s44
    %s48 = sshll.u32 3, 24
    %s49 = sxor.u32 4294967295, %s48
    %s50 = sand.u32 0, %s49
    %s52 = sor.u32 %s50, 0
    %55 = sst [smem:[#allocation6]] 128
    %s56 = scalar_lea.smem [#allocation6], 1
    %57 = sst [smem:[%s56]] 64
    %s58 = scalar_lea.smem [#allocation6], 2
    %59 = sst [smem:[%s58]] 1
    %61 = dma.general %s35, 64, %s41, %s42, [#allocation5], [#allocation6], %s52, 0
  $region6: #{tpu_custom_call.1} parent=0 // loop_footer
    %s16 = sadd.s32 1, %s12
  $region7: #{tpu_custom_call.1} parent=0 // loop_footer_branch
    %11 = sbr.rel target = $region3
  $region8: #{tpu_custom_call.1} parent=0 // loop_exit
    _
  loop: start=0, step=1, limit=4
  $region9: #{tpu_custom_call.1} parent=0 // loop_pre_header
    _
  $region10: #{tpu_custom_call.1} parent=0 // loop_header
    %s63 = sphi 0, %s67
    %p64 = scmp.ge.s32.totalorder %s63, 4
  $region11: #{tpu_custom_call.1} parent=0 // loop_header_branch
    %66 = sbr.rel (%p64) target = $region15
  $region12: #{tpu_custom_call.1} parent=0 // loop_body
    %s68 = sld [smem:[#allocation4 + %s63]]
    %p69 = scmp.lt.s32.totalorder %s63, 0
    %s70 = ssub.s32 0, %s63
    %s71 = scalar_select %p69, %s70, %s63
    %s72 = sand.u32 %s71, 3
    %s73 = ssub.s32 0, %s72
    %s74 = scalar_select %p69, %s73, %s72
    %p75 = scmp.ne.s32.totalorder %s74, 0
    %p76 = scmp.lt.s32.totalorder %s74, 0
    %p77 = pnand %p76, %p75
    %p78 = pneg %p77
    %s79 = sadd.s32 %s74, 4
    %s80 = scalar_select %p78, %s79, %s74
    %s81 = scalar_lea.sflag [#allocation2], %s80
    %s82 = smul.u32 1, 4
    %s83 = sshll.u32 %s82, 4
    %84 = dma.done %s81, %s83
    %s85 = sadd.s32 %s63, 4
    %p86 = scmp.lt.s32.totalorder %s85, 4
    // Predicated region
    $region16: #{tpu_custom_call.1} parent=12 // pred_check
      %p87 = pneg %p86
    $region17: #{tpu_custom_call.1} parent=12 // pred_check_branch
      %89 = sbr.rel (%p87) target = $region19
    $region18: #{tpu_custom_call.1} parent=12 // pred_region
      #allocation8 [shape = 'u32[3]{0}', space=smem, size = 0xc, scoped, tag = 'DMA stride descriptor']
      %s90 = sld [smem:[#allocation4 + %s85]]
      %p91 = scmp.lt.s32.totalorder %s85, 0
      %s92 = ssub.s32 0, %s85
      %s93 = scalar_select %p91, %s92, %s85
      %s94 = sand.u32 %s93, 3
      %s95 = ssub.s32 0, %s94
      %s96 = scalar_select %p91, %s95, %s94
      %p97 = scmp.ne.s32.totalorder %s96, 0
      %p98 = scmp.lt.s32.totalorder %s96, 0
      %p99 = pnand %p98, %p97
      %p100 = pneg %p99
      %s101 = sadd.s32 %s96, 4
      %s102 = scalar_select %p100, %s101, %s96
      %s103 = sshrl.u32 %s90, 3
      %s104 = sand.u32 %s90, 7
      %s105 = smul.u32 %s103, 32
      %s106 = sadd.s32 %s104, %s105
      %s107 = smul.addr %s106, 16
      %s108 = scalar_lea.hbm %s1, %s107
      %s109 = sshrl.u32 %s85, 2
      %s110 = sand.u32 %s85, 3
      %s111 = smul.u32 %s109, 16
      %s112 = sadd.s32 %s110, %s111
      %s113 = smul.addr %s112, 16
      %s114 = scalar_lea.hbm %s2, %s113
      %s115 = scalar_lea.sflag [#allocation2], %s102
      %s117 = sshll.u32 1, 14
      %s118 = sxor.u32 4294967295, %s117
      %s121 = sshll.u32 3, 24
      %s122 = sxor.u32 4294967295, %s121
      %s123 = sand.u32 0, %s122
      %s125 = sor.u32 %s123, 0
      %128 = sst [smem:[#allocation8]] 128
      %s129 = scalar_lea.smem [#allocation8], 1
      %130 = sst [smem:[%s129]] 64
      %s131 = scalar_lea.smem [#allocation8], 2
      %132 = sst [smem:[%s131]] 1
      %134 = dma.general %s108, 64, %s114, %s115, [#allocation7], [#allocation8], %s125, 0
    $region19: #{tpu_custom_call.1} parent=12 // pred_fallthru
      _
  $region13: #{tpu_custom_call.1} parent=0 // loop_footer
    %s67 = sadd.s32 1, %s63
  $region14: #{tpu_custom_call.1} parent=0 // loop_footer_branch
    %62 = sbr.rel target = $region10
  $region15: #{tpu_custom_call.1} parent=0 // loop_exit
    _
  %135 = vsyncmov [#allocation2]
  %s136 = vpop.sfrf %135
  %p137 = scmp.eq.s32.totalorder %s136, 0
  %p138 = pneg %p137
  %140 = shalt.err (%p138)
  %s141 = scalar_lea.sflag [#allocation2], 1
  %142 = vsyncmov %s141
  %s143 = vpop.sfrf %142
  %p144 = scmp.eq.s32.totalorder %s143, 0
  %p145 = pneg %p144
  %147 = shalt.err (%p145)
  %s148 = scalar_lea.sflag [#allocation2], 2
  %149 = vsyncmov %s148
  %s150 = vpop.sfrf %149
  %p151 = scmp.eq.s32.totalorder %s150, 0
  %p152 = pneg %p151
  %154 = shalt.err (%p152)
  %s155 = scalar_lea.sflag [#allocation2], 3
  %156 = vsyncmov %s155
  %s157 = vpop.sfrf %156
  %p158 = scmp.eq.s32.totalorder %s157, 0
  %p159 = pneg %p158
  %161 = shalt.err (%p159)

</llo_original>
